<compile_context>
chip_gen: v6e
topology: v6e:2x2x1
jax: 0.10.0
libtpu: 0.0.40
codegen_flags: <defaults>
</compile_context>

<pallas_src>
import functools

import jax
import jax.numpy as jnp
from jax.experimental import pallas as pl
from jax.experimental.pallas import tpu as pltpu


# --------------------------------------------------------------------------
# Kernel: per (batch n, spatial tile) compute, channels-major layout
#   g1   = Wg^T @ g                         (F_int, T)   bf16 MXU, f32 acc
#   x1   = Wx^T @ x                         (F_int, T)
#   h    = relu(g1 + x1 + (bg + bx))        (F_int, T)   f32
#   psi  = sigmoid(wp . h + bpsi)           (1, T)       lane-dense
#   out  = x * psi                          (F_l, T)
# --------------------------------------------------------------------------
def _attention_block_kernel(g_ref, x_ref, wg_ref, wx_ref, b_ref, wp_ref,
                            bp_ref, out_ref, *, mxu_psi):
    mm_dtype = wg_ref.dtype                      # bf16 by default
    g = g_ref[0]                                 # (F_g, T), native dtype
    x = x_ref[0]                                 # (F_l, T), native dtype

    g1 = jnp.dot(wg_ref[...], g.astype(mm_dtype),
                 preferred_element_type=jnp.float32)
    x1 = jnp.dot(wx_ref[...], x.astype(mm_dtype),
                 preferred_element_type=jnp.float32)
    h = jnp.maximum(g1 + x1 + b_ref[...], 0.0)   # (F_int, T), f32

    if mxu_psi:
        # Large F_int: do the F_int -> 1 projection on the MXU (8-row weight
        # block, row 0 = wp^T, rest zero) instead of VALU adds + XLU reduce.
        p = jnp.dot(wp_ref[...], h.astype(wp_ref.dtype),
                    preferred_element_type=jnp.float32)      # (8, T)
        psi_logit = p[0:1, :] + bp_ref[0]
    else:
        # Small F_int: VPU multiply + cross-sublane reduce is near-free.
        psi_logit = jnp.sum(h * wp_ref[...], axis=0, keepdims=True) + bp_ref[0]
    psi = jax.nn.sigmoid(psi_logit)              # (1, T), f32

    out_ref[0] = (x.astype(jnp.float32) * psi).astype(out_ref.dtype)


# --------------------------------------------------------------------------
# Host-side helpers
# --------------------------------------------------------------------------
def _fold_bn(w, b, gamma, beta, mean, var, eps=1e-5):
    """Fold inference-mode BatchNorm into a 1x1-conv weight/bias.

    w: (C_in, C_out), b: (C_out,) -> folded (C_in, C_out), (C_out,)
    """
    scale = gamma / jnp.sqrt(var + eps)
    return w * scale[None, :], (b - mean) * scale + beta


def _round_up(x, m):
    return ((x + m - 1) // m) * m


def _vmem_capacity():
    try:
        return int(pltpu.get_tpu_info().vmem_capacity_bytes)
    except Exception:
        return 64 << 20          # conservative (v7x-sized) fallback


def _tile_cap(F_g, F_l, F_int, in_bytes, out_bytes):
    """Largest spatial tile (multiple of 128) we are willing to use."""
    io_per_lane = in_bytes * (F_g + F_l) + out_bytes * F_l
    tmp_per_lane = 4 * (3 * F_int + 8)           # f32 g1/x1/h + psi headroom
    cap = (2 << 20) // io_per_lane               # ~2 MiB of I/O per grid step
    cap = max(1024, min(8192, cap))
    # Keep double-buffered I/O + intermediates inside a per-generation VMEM
    # budget (also fits v5e's 16 MiB default scoped limit).
    budget = min(_vmem_capacity() // 4, 16 << 20)
    cap = min(cap, budget // (2 * io_per_lane + tmp_per_lane))
    return max(128, (cap // 128) * 128)


def _pick_tile(HW, cap):
    """Pick (tile, padded_HW) avoiding host-side padding whenever possible."""
    if HW % 128 == 0:
        # Largest multiple-of-128 divisor of HW that fits the cap: no padding.
        for t in range(min(cap, HW), 127, -128):
            if HW % t == 0:
                return t, HW
        return 128, HW
    if HW <= cap:
        # Small ragged spatial extent: one full-extent block, no padding.
        return HW, HW
    # Rare: large, non-128-aligned spatial extent.  Pad only to the next
    # multiple of 128 (minimal copy), never a full tile.
    # TODO(synk): could be removed entirely with an in-kernel ragged-tile mask.
    HW128 = _round_up(HW, 128)
    for t in range(min(cap, HW128), 127, -128):
        if HW128 % t == 0:
            return t, HW128
    return 128, HW128


# --------------------------------------------------------------------------
# Wrapper
# --------------------------------------------------------------------------
def attention_block(g, x, params, *, compute_dtype=jnp.bfloat16, tile_hw=None):
    """g: (N, F_g, H, W), x: (N, F_l, H, W); returns (N, F_l, H, W)."""
    N, F_g, H, W = g.shape
    _, F_l, _, _ = x.shape
    HW = H * W

    wg, bg = _fold_bn(params["wg"], params["bg"], *params["bn_g"])  # (F_g,F_int)
    wx, bx = _fold_bn(params["wx"], params["bx"], *params["bn_x"])  # (F_l,F_int)
    wp, bp = _fold_bn(params["wp"], params["bp"], *params["bn_p"])  # (F_int,1)
    F_int = wg.shape[1]

    # NCHW -> (N, C, H*W): free reshape; channels on sublanes, spatial on lanes.
    g3 = g.reshape(N, F_g, HW)
    x3 = x.reshape(N, F_l, HW)

    in_bytes = jnp.dtype(g.dtype).itemsize
    out_dtype = x.dtype
    out_bytes = jnp.dtype(out_dtype).itemsize

    if tile_hw is None:
        cap = _tile_cap(F_g, F_l, F_int, in_bytes, out_bytes)
    else:
        cap = max(128, (tile_hw // 128) * 128)
    tile, HWp = _pick_tile(HW, cap)

    # v7x has 2 TensorCores: keep >= 2 parallel grid steps when possible.
    if N * (HWp // tile) < 2 and HWp % 128 == 0 and tile > 128:
        tile, HWp = _pick_tile(HWp, max(128, ((tile // 2) // 128) * 128))

    if HWp != HW:
        pad = HWp - HW
        g3 = jnp.pad(g3, ((0, 0), (0, 0), (0, pad)))
        x3 = jnp.pad(x3, ((0, 0), (0, 0), (0, pad)))

    # Weights transposed for left-multiplication; matmul operands in
    # compute_dtype (native bf16 MXU path), accumulation stays f32 in-kernel.
    wgT = jnp.transpose(wg).astype(compute_dtype)          # (F_int, F_g)
    wxT = jnp.transpose(wx).astype(compute_dtype)          # (F_int, F_l)
    b_comb = (bg + bx).reshape(F_int, 1).astype(jnp.float32)  # combined bias
    bp_s = bp.reshape(1).astype(jnp.float32)               # 1-D SMEM scalar

    mxu_psi = F_int >= 128
    if mxu_psi:
        wp_arr = jnp.zeros((8, F_int), compute_dtype).at[0].set(
            wp[:, 0].astype(compute_dtype))
        wp_spec = pl.BlockSpec((8, F_int), lambda n, i: (0, 0))
    else:
        wp_arr = wp.reshape(F_int, 1).astype(jnp.float32)
        wp_spec = pl.BlockSpec((F_int, 1), lambda n, i: (0, 0))

    # Explicit VMEM limit: raises v5e's 16 MiB default scope when needed,
    # stays well inside v7x's 64 MiB physical VMEM.
    io_step = (in_bytes * (F_g + F_l) + out_bytes * F_l) * tile
    tmp_step = 4 * (3 * F_int + 8) * tile
    w_step = (F_int * (F_g + F_l + 8)) * jnp.dtype(compute_dtype).itemsize \
        + 8 * F_int
    working = 2 * io_step + tmp_step + w_step
    vmem_limit = int(min(_vmem_capacity() * 3 // 4, max(32 << 20, 2 * working)))

    grid = (N, HWp // tile)
    kernel = functools.partial(_attention_block_kernel, mxu_psi=mxu_psi)
    out = pl.pallas_call(
        kernel,
        out_shape=jax.ShapeDtypeStruct((N, F_l, HWp), out_dtype),
        grid_spec=pltpu.PrefetchScalarGridSpec(
            num_scalar_prefetch=0,
            grid=grid,
            in_specs=[
                pl.BlockSpec((1, F_g, tile), lambda n, i: (n, 0, i)),   # g tile
                pl.BlockSpec((1, F_l, tile), lambda n, i: (n, 0, i)),   # x tile
                pl.BlockSpec((F_int, F_g), lambda n, i: (0, 0)),        # Wg^T
                pl.BlockSpec((F_int, F_l), lambda n, i: (0, 0)),        # Wx^T
                pl.BlockSpec((F_int, 1), lambda n, i: (0, 0)),          # bg+bx
                wp_spec,                                                # wpsi
                pl.BlockSpec(memory_space=pltpu.MemorySpace.SMEM),      # bpsi
            ],
            out_specs=pl.BlockSpec((1, F_l, tile), lambda n, i: (n, 0, i)),
        ),
        compiler_params=pltpu.CompilerParams(
            dimension_semantics=("parallel", "parallel"),
            vmem_limit_bytes=vmem_limit),
    )(g3, x3, wgT, wxT, b_comb, wp_arr, bp_s)

    if HWp != HW:
        out = out[:, :, :HW]
    return out.reshape(N, F_l, H, W)


# --------------------------------------------------------------------------
# Pure-JAX reference (f32, same folded-BN inference semantics)
# --------------------------------------------------------------------------
def attention_block_reference(g, x, params):
    N, F_g, H, W = g.shape
    _, F_l, _, _ = x.shape
    wg, bg = _fold_bn(params["wg"], params["bg"], *params["bn_g"])
    wx, bx = _fold_bn(params["wx"], params["bx"], *params["bn_x"])
    wp, bp = _fold_bn(params["wp"], params["bp"], *params["bn_p"])
    g_t = jnp.transpose(g, (0, 2, 3, 1)).reshape(-1, F_g).astype(jnp.float32)
    x_t = jnp.transpose(x, (0, 2, 3, 1)).reshape(-1, F_l).astype(jnp.float32)
    g1 = g_t @ wg + bg
    x1 = x_t @ wx + bx
    h = jnp.maximum(g1 + x1, 0.0)
    psi = jax.nn.sigmoid(h @ wp + bp)
    out = x_t * psi
    return jnp.transpose(out.reshape(N, H, W, F_l), (0, 3, 1, 2)).astype(x.dtype)


def init_params(key, F_g, F_l, F_int):
    """Synthetic parameters matching the PyTorch module shapes.

    1x1-conv weights are stored transposed as (C_in, C_out).  BatchNorm is
    applied in inference form (running stats) and folded into the conv.
    TODO(synk): training-mode BatchNorm (batch statistics) is not implemented.
    """
    ks = jax.random.split(key, 12)

    def bn(k, c):
        gamma = 1.0 + 0.1 * jax.random.normal(k, (c,), jnp.float32)
        beta = 0.05 * jax.random.normal(jax.random.fold_in(k, 1), (c,), jnp.float32)
        mean = 0.02 * jax.random.normal(jax.random.fold_in(k, 2), (c,), jnp.float32)
        var = jnp.abs(1.0 + 0.1 * jax.random.normal(jax.random.fold_in(k, 3),
                                                    (c,), jnp.float32))
        return (gamma, beta, mean, var)

    return {
        "wg": 0.1 * jax.random.normal(ks[0], (F_g, F_int), jnp.float32),
        "bg": 0.1 * jax.random.normal(ks[1], (F_int,), jnp.float32),
        "bn_g": bn(ks[2], F_int),
        "wx": 0.1 * jax.random.normal(ks[3], (F_l, F_int), jnp.float32),
        "bx": 0.1 * jax.random.normal(ks[4], (F_int,), jnp.float32),
        "bn_x": bn(ks[5], F_int),
        "wp": 0.1 * jax.random.normal(ks[6], (F_int, 1), jnp.float32),
        "bp": 0.1 * jax.random.normal(ks[7], (1,), jnp.float32),
        "bn_p": bn(ks[8], 1),
    }


if __name__ == "__main__":
    import numpy as np

    key = jax.random.PRNGKey(0)
    kg, kx, kp = jax.random.split(key, 3)

    N, F_g, F_l, F_int, H, W = 2, 4, 4, 8, 16, 16
    g = jax.random.normal(kg, (N, F_g, H, W), jnp.float32)
    x = jax.random.normal(kx, (N, F_l, H, W), jnp.float32)
    params = init_params(kp, F_g, F_l, F_int)

    ref = attention_block_reference(g, x, params)
    jax.block_until_ready(ref)

    # f32-compute path: tight tolerance (validates kernel structure exactly).
    out_f32 = attention_block(g, x, params, compute_dtype=jnp.float32)
    jax.block_until_ready(out_f32)
    assert out_f32.shape == (N, F_l, H, W) and out_f32.dtype == jnp.float32
    np.testing.assert_allclose(np.asarray(out_f32), np.asarray(ref),
                               rtol=1e-4, atol=1e-4)

    # Default bf16-MXU path: looser tolerance (bf16 matmul operands, f32 acc).
    out = attention_block(g, x, params)
    jax.block_until_ready(out)
    assert out.shape == (N, F_l, H, W) and out.dtype == jnp.float32
    np.testing.assert_allclose(np.asarray(out), np.asarray(ref),
                               rtol=2e-2, atol=2e-2)

    print("KERNEL_OK")
</pallas_src>

<mosaic_0001>
module attributes {stable_mosaic.version = 11 : i64} {
  func.func @_attention_block_kernel(%arg0: i32, %arg1: i32, %arg2: memref<1x4x256xf32, #tpu.memory_space<vmem>>, %arg3: memref<1x4x256xf32, #tpu.memory_space<vmem>>, %arg4: memref<8x4xf32, #tpu.memory_space<vmem>>, %arg5: memref<8x4xf32, #tpu.memory_space<vmem>>, %arg6: memref<8x1xf32, #tpu.memory_space<vmem>>, %arg7: memref<8x1xf32, #tpu.memory_space<vmem>>, %arg8: memref<1xf32, #tpu.memory_space<smem>>, %arg9: memref<1x4x256xf32, #tpu.memory_space<vmem>>) attributes {dimension_semantics = [#tpu.dimension_semantics<parallel>, #tpu.dimension_semantics<parallel>], iteration_bounds = array<i64: 2, 1>, scalar_prefetch = 0 : i64, scratch_operands = 0 : i64, tpu.core_type = #tpu.core_type<tc>, window_params = [{transform_indices = @transform_0, window_bounds = array<i64: 1, 4, 256>}, {transform_indices = @transform_1, window_bounds = array<i64: 1, 4, 256>}, {pipeline_mode = #tpu.pipeline_mode<synchronous>, transform_indices = @transform_2, window_bounds = array<i64: 8, 4>}, {pipeline_mode = #tpu.pipeline_mode<synchronous>, transform_indices = @transform_3, window_bounds = array<i64: 8, 4>}, {pipeline_mode = #tpu.pipeline_mode<synchronous>, transform_indices = @transform_4, window_bounds = array<i64: 8, 1>}, {pipeline_mode = #tpu.pipeline_mode<synchronous>, transform_indices = @transform_5, window_bounds = array<i64: 8, 1>}, {transform_indices = @transform_6, window_bounds = array<i64: 1>}, {transform_indices = @transform_7, window_bounds = array<i64: 1, 4, 256>}]} {
    %c0 = arith.constant 0 : index
    %c0_0 = arith.constant 0 : index
    %c0_1 = arith.constant 0 : index
    %0 = vector.load %arg2[%c0, %c0_0, %c0_1] : memref<1x4x256xf32, #tpu.memory_space<vmem>>, vector<1x4x256xf32>
    %1 = vector.shape_cast %0 : vector<1x4x256xf32> to vector<4x256xf32>
    %c0_2 = arith.constant 0 : index
    %c0_3 = arith.constant 0 : index
    %c0_4 = arith.constant 0 : index
    %2 = vector.load %arg3[%c0_2, %c0_3, %c0_4] : memref<1x4x256xf32, #tpu.memory_space<vmem>>, vector<1x4x256xf32>
    %3 = vector.shape_cast %2 : vector<1x4x256xf32> to vector<4x256xf32>
    %c0_5 = arith.constant 0 : index
    %c0_6 = arith.constant 0 : index
    %4 = vector.load %arg4[%c0_5, %c0_6] : memref<8x4xf32, #tpu.memory_space<vmem>>, vector<8x4xf32>
    %cst = arith.constant dense<0.000000e+00> : vector<8x256xf32>
    %5 = tpu.matmul %4, %1, %cst {dimension_numbers = #tpu.dot_dimension_numbers<[1], [0], [0], [1], [0, 0, 1, 1], [], []>} : vector<8x4xf32>, vector<4x256xf32>, vector<8x256xf32> -> vector<8x256xf32>
    %c0_7 = arith.constant 0 : index
    %c0_8 = arith.constant 0 : index
    %6 = vector.load %arg5[%c0_7, %c0_8] : memref<8x4xf32, #tpu.memory_space<vmem>>, vector<8x4xf32>
    %cst_9 = arith.constant dense<0.000000e+00> : vector<8x256xf32>
    %7 = tpu.matmul %6, %3, %cst_9 {dimension_numbers = #tpu.dot_dimension_numbers<[1], [0], [0], [1], [0, 0, 1, 1], [], []>} : vector<8x4xf32>, vector<4x256xf32>, vector<8x256xf32> -> vector<8x256xf32>
    %8 = arith.addf %5, %7 : vector<8x256xf32>
    %c0_10 = arith.constant 0 : index
    %c0_11 = arith.constant 0 : index
    %9 = vector.load %arg6[%c0_10, %c0_11] : memref<8x1xf32, #tpu.memory_space<vmem>>, vector<8x1xf32>
    %10 = vector.broadcast %9 : vector<8x1xf32> to vector<8x256xf32>
    %11 = arith.addf %8, %10 : vector<8x256xf32>
    %cst_12 = arith.constant 0.000000e+00 : f32
    %12 = vector.broadcast %cst_12 : f32 to vector<8x256xf32>
    %13 = arith.maximumf %11, %12 : vector<8x256xf32>
    %c0_13 = arith.constant 0 : index
    %c0_14 = arith.constant 0 : index
    %14 = vector.load %arg7[%c0_13, %c0_14] : memref<8x1xf32, #tpu.memory_space<vmem>>, vector<8x1xf32>
    %15 = vector.broadcast %14 : vector<8x1xf32> to vector<8x256xf32>
    %16 = arith.mulf %13, %15 : vector<8x256xf32>
    %cst_15 = arith.constant dense<0.000000e+00> : vector<256xf32>
    %17 = vector.multi_reduction <add>, %16, %cst_15 [0] : vector<8x256xf32> to vector<256xf32>
    %18 = vector.shape_cast %17 : vector<256xf32> to vector<1x256xf32>
    %c0_16 = arith.constant 0 : index
    %19 = memref.load %arg8[%c0_16] : memref<1xf32, #tpu.memory_space<smem>>
    %20 = vector.broadcast %19 : f32 to vector<1x256xf32>
    %21 = arith.addf %18, %20 : vector<1x256xf32>
    %22 = arith.negf %21 : vector<1x256xf32>
    %23 = math.exp %22 : vector<1x256xf32>
    %cst_17 = arith.constant 1.000000e+00 : f32
    %24 = vector.broadcast %cst_17 : f32 to vector<1x256xf32>
    %25 = arith.addf %24, %23 : vector<1x256xf32>
    %26 = arith.divf %24, %25 : vector<1x256xf32>
    %27 = vector.broadcast %26 : vector<1x256xf32> to vector<4x256xf32>
    %28 = arith.mulf %3, %27 : vector<4x256xf32>
    %c0_18 = arith.constant 0 : index
    %c0_19 = arith.constant 0 : index
    %c0_20 = arith.constant 0 : index
    %29 = vector.load %arg9[%c0_18, %c0_19, %c0_20] : memref<1x4x256xf32, #tpu.memory_space<vmem>>, vector<1x4x256xf32>
    %30 = vector.shape_cast %29 : vector<1x4x256xf32> to vector<4x256xf32>
    %31 = vector.shape_cast %28 : vector<4x256xf32> to vector<1x4x256xf32>
    tpu.vector_store %arg9[%c0_18, %c0_19, %c0_20], %31 {strides = array<i32>} : memref<1x4x256xf32, #tpu.memory_space<vmem>>, vector<1x4x256xf32>,
    return
  }
  func.func @transform_0(%arg0: i32, %arg1: i32) -> (i32, i32, i32) {
    %c0_i32 = arith.constant 0 : i32
    %c0_i32_0 = arith.constant 0 : i32
    return %arg0, %c0_i32, %arg1 : i32, i32, i32
  }
  func.func @transform_1(%arg0: i32, %arg1: i32) -> (i32, i32, i32) {
    %c0_i32 = arith.constant 0 : i32
    %c0_i32_0 = arith.constant 0 : i32
    return %arg0, %c0_i32, %arg1 : i32, i32, i32
  }
  func.func @transform_2(%arg0: i32, %arg1: i32) -> (i32, i32) {
    %c0_i32 = arith.constant 0 : i32
    %c0_i32_0 = arith.constant 0 : i32
    %c0_i32_1 = arith.constant 0 : i32
    return %c0_i32, %c0_i32_0 : i32, i32
  }
  func.func @transform_3(%arg0: i32, %arg1: i32) -> (i32, i32) {
    %c0_i32 = arith.constant 0 : i32
    %c0_i32_0 = arith.constant 0 : i32
    %c0_i32_1 = arith.constant 0 : i32
    return %c0_i32, %c0_i32_0 : i32, i32
  }
  func.func @transform_4(%arg0: i32, %arg1: i32) -> (i32, i32) {
    %c0_i32 = arith.constant 0 : i32
    %c0_i32_0 = arith.constant 0 : i32
    %c0_i32_1 = arith.constant 0 : i32
    return %c0_i32, %c0_i32_0 : i32, i32
  }
  func.func @transform_5(%arg0: i32, %arg1: i32) -> (i32, i32) {
    %c0_i32 = arith.constant 0 : i32
    %c0_i32_0 = arith.constant 0 : i32
    %c0_i32_1 = arith.constant 0 : i32
    return %c0_i32, %c0_i32_0 : i32, i32
  }
  func.func @transform_6(%arg0: i32, %arg1: i32) -> i32 {
    %c0_i32 = arith.constant 0 : i32
    %c0_i32_0 = arith.constant 0 : i32
    return %c0_i32 : i32
  }
  func.func @transform_7(%arg0: i32, %arg1: i32) -> (i32, i32, i32) {
    %c0_i32 = arith.constant 0 : i32
    %c0_i32_0 = arith.constant 0 : i32
    return %arg0, %c0_i32, %arg1 : i32, i32, i32
  }
}

</mosaic_0001>

<llo_original>
// kernel: tpu_custom_call.1
$region0: #{tpu_custom_call.1}
  #allocation0 [shape = 'u32[]', space=smem, size = 0x4, offset = 0x4, fixed_abs, tag = 'smem constant byte address 0x4 - core index']
  #allocation1 [shape = 'u32[144,128]{1,0:T(1,128)}', space=vmem, size = 0x12000, scoped, tag = 'internal scratch']
  #allocation2 [shape = 'f32[1]{0:T(128)S(6)}', space=smem, size = 0x200, scoped, tag = 'scoped memory for tpu_custom_call.1']
  %s0 = inlined_call_operand.vmem [shape: f32[2,4,256], index: 0, kind: input, shape index: {}]
  %s1 = inlined_call_operand.vmem [shape: f32[2,4,256], index: 1, kind: input, shape index: {}]
  %s2 = inlined_call_operand.vmem [shape: f32[8,4], index: 2, kind: input, shape index: {}]
  %s3 = inlined_call_operand.vmem [shape: f32[8,4], index: 3, kind: input, shape index: {}]
  %s4 = inlined_call_operand.vmem [shape: f32[8,1], index: 4, kind: input, shape index: {}]
  %s5 = inlined_call_operand.vmem [shape: f32[8,1], index: 5, kind: input, shape index: {}]
  %s6 = inlined_call_operand.<no memory space> [shape: f32[1], index: 6, kind: input, shape index: {}]
  %s7 = inlined_call_operand.hbm [shape: f32[2,4,256], index: 7, kind: output, shape index: {}]
  %s8 = sld [smem:[#allocation0]]
  $region61: #{tpu_custom_call.1} parent=0
    _
  %s10 = ssub.s32 1, %s8
  %s11 = scalar_select 0, %s10, %s8
  %12 = sst [smem:[#allocation2]] %s6
  $region1: #{tpu_custom_call.1} parent=0
    #allocation3 [shape = 'u8[8192]{0}', space=vmem, size = 0x2000, scoped, tag = 'output window, operand 0']
    #allocation4 [shape = 's32[2]{0}', space=sflag, size = 0x8, scoped, tag = 'scoped memory for tpu_custom_call.1']
    %13 = vsyncpa [#allocation4], 0
    %s14 = scalar_lea.sflag [#allocation4], 1
    %15 = vsyncpa %s14, 0
    loop: start=0, step=1, limit=4
    $region2: #{tpu_custom_call.1} parent=1 // loop_pre_header
      _
    $region3: #{tpu_custom_call.1} parent=1 // loop_header
      %s17 = sphi 0, %s21
      %p18 = scmp.ge.s32.totalorder %s17, 4
      %s24 = sphi 0, %s36
      %s25 = sphi 0, %s32
      %s26 = sphi 0, %s24
      %s27 = sphi 0, %s25
      %s28 = sphi 0, %s26
      %s29 = sphi 0, %s27
      %s41 = sphi 0, %s43
      %s44 = sphi 0, %s41
      %s45 = sphi 0, %s44
      %s61 = sphi 0, %s45
      %s69 = sphi 0, %s71
      %s72 = sphi 0, %s69
      %s73 = sphi 0, %s72
      %s89 = sphi 0, %s73
      %s93 = sphi 0, %s93
      %s95 = sphi 0, %s93
      %s96 = sphi 0, %s95
      %s110 = sphi 0, %s96
      %s114 = sphi 0, %s114
      %s116 = sphi 0, %s114
      %s117 = sphi 0, %s116
      %s131 = sphi 0, %s117
      %s135 = sphi 0, %s135
      %s137 = sphi 0, %s135
      %s138 = sphi 0, %s137
      %s152 = sphi 0, %s138
      %s156 = sphi 0, %s156
      %s158 = sphi 0, %s156
      %s159 = sphi 0, %s158
      %s173 = sphi 0, %s159
      %s177 = sphi 0, %s177
      %s179 = sphi 0, %s177
      %s180 = sphi 0, %s179
      %s194 = sphi 0, %s180
      %s202 = sphi 0, %s204
      %s205 = sphi 0, %s202
      %s206 = sphi 0, %s205
      %s222 = sphi 0, %s206
    $region4: #{tpu_custom_call.1} parent=1 // loop_header_branch
      %20 = sbr.rel (%p18) target = $region8
    $region5: #{tpu_custom_call.1} parent=1 // loop_body
      %s22 = ssub.s32 %s17, 1
      %s23 = ssub.s32 %s17, 2
      %s30 = sadd.s32 1, %s25
      %p31 = scmp.ge.s32.totalorder %s30, 1
      %s32 = scalar_select %p31, 0, %s30
      %s33 = sadd.s32 1, %s24
      %s34 = scalar_select %p31, %s33, %s24
      %p35 = scmp.ge.s32.totalorder %s34, 2
      %s36 = scalar_select %p35, 0, %s34
      %s37 = ssub.s32 %s24, %s36
      %s38 = ssub.s32 %s25, %s32
      %s39 = sor.u32 %s37, %s38
      %p40 = scmp.eq.s32.totalorder %s39, 0
      %s42 = sadd.s32 %s41, 1
      %s43 = scalar_select %p40, %s41, %s42
      %p46 = pneg %p40
      %p47 = scmp.eq.s32.totalorder %s17, 1
      %p48 = por %p46, %p47
      %p49 = scmp.ne.s32.totalorder %s41, %s44
      %p50 = scmp.eq.s32.totalorder %s17, 0
      %p51 = por %p49, %p50
      %p52 = scmp.ne.s32.totalorder %s41, %s44
      %p53 = scmp.eq.s32.totalorder %s22, 1
      %p54 = por %p52, %p53
      %p55 = scmp.ne.s32.totalorder %s44, %s45
      %p56 = scmp.eq.s32.totalorder %s22, 0
      %p57 = por %p55, %p56
      %p58 = scmp.ne.s32.totalorder %s44, %s45
      %p59 = scmp.eq.s32.totalorder %s23, 1
      %p60 = por %p58, %p59
      %p62 = scmp.ne.s32.totalorder %s45, %s61
      %p63 = scmp.eq.s32.totalorder %s23, 0
      %p64 = por %p62, %p63
      %s65 = ssub.s32 %s24, %s36
      %s66 = ssub.s32 %s25, %s32
      %s67 = sor.u32 %s65, %s66
      %p68 = scmp.eq.s32.totalorder %s67, 0
      %s70 = sadd.s32 %s69, 1
      %s71 = scalar_select %p68, %s69, %s70
      %p74 = pneg %p68
      %p75 = scmp.eq.s32.totalorder %s17, 1
      %p76 = por %p74, %p75
      %p77 = scmp.ne.s32.totalorder %s69, %s72
      %p78 = scmp.eq.s32.totalorder %s17, 0
      %p79 = por %p77, %p78
      %p80 = scmp.ne.s32.totalorder %s69, %s72
      %p81 = scmp.eq.s32.totalorder %s22, 1
      %p82 = por %p80, %p81
      %p83 = scmp.ne.s32.totalorder %s72, %s73
      %p84 = scmp.eq.s32.totalorder %s22, 0
      %p85 = por %p83, %p84
      %p86 = scmp.ne.s32.totalorder %s72, %s73
      %p87 = scmp.eq.s32.totalorder %s23, 1
      %p88 = por %p86, %p87
      %p90 = scmp.ne.s32.totalorder %s73, %s89
      %p91 = scmp.eq.s32.totalorder %s23, 0
      %p92 = por %p90, %p91
      %s94 = sadd.s32 %s93, 1
      %p97 = scmp.eq.s32.totalorder %s17, 1
      %p98 = scmp.ne.s32.totalorder %s93, %s95
      %p99 = scmp.eq.s32.totalorder %s17, 0
      %p100 = por %p98, %p99
      %p101 = scmp.ne.s32.totalorder %s93, %s95
      %p102 = scmp.eq.s32.totalorder %s22, 1
      %p103 = por %p101, %p102
      %p104 = scmp.ne.s32.totalorder %s95, %s96
      %p105 = scmp.eq.s32.totalorder %s22, 0
      %p106 = por %p104, %p105
      %p107 = scmp.ne.s32.totalorder %s95, %s96
      %p108 = scmp.eq.s32.totalorder %s23, 1
      %p109 = por %p107, %p108
      %p111 = scmp.ne.s32.totalorder %s96, %s110
      %p112 = scmp.eq.s32.totalorder %s23, 0
      %p113 = por %p111, %p112
      %s115 = sadd.s32 %s114, 1
      %p118 = scmp.eq.s32.totalorder %s17, 1
      %p119 = scmp.ne.s32.totalorder %s114, %s116
      %p120 = scmp.eq.s32.totalorder %s17, 0
      %p121 = por %p119, %p120
      %p122 = scmp.ne.s32.totalorder %s114, %s116
      %p123 = scmp.eq.s32.totalorder %s22, 1
      %p124 = por %p122, %p123
      %p125 = scmp.ne.s32.totalorder %s116, %s117
      %p126 = scmp.eq.s32.totalorder %s22, 0
      %p127 = por %p125, %p126
      %p128 = scmp.ne.s32.totalorder %s116, %s117
      %p129 = scmp.eq.s32.totalorder %s23, 1
      %p130 = por %p128, %p129
      %p132 = scmp.ne.s32.totalorder %s117, %s131
      %p133 = scmp.eq.s32.totalorder %s23, 0
      %p134 = por %p132, %p133
      %s136 = sadd.s32 %s135, 1
      %p139 = scmp.eq.s32.totalorder %s17, 1
      %p140 = scmp.ne.s32.totalorder %s135, %s137
      %p141 = scmp.eq.s32.totalorder %s17, 0
      %p142 = por %p140, %p141
      %p143 = scmp.ne.s32.totalorder %s135, %s137
      %p144 = scmp.eq.s32.totalorder %s22, 1
      %p145 = por %p143, %p144
      %p146 = scmp.ne.s32.totalorder %s137, %s138
      %p147 = scmp.eq.s32.totalorder %s22, 0
      %p148 = por %p146, %p147
      %p149 = scmp.ne.s32.totalorder %s137, %s138
      %p150 = scmp.eq.s32.totalorder %s23, 1
      %p151 = por %p149, %p150
      %p153 = scmp.ne.s32.totalorder %s138, %s152
      %p154 = scmp.eq.s32.totalorder %s23, 0
      %p155 = por %p153, %p154
      %s157 = sadd.s32 %s156, 1
      %p160 = scmp.eq.s32.totalorder %s17, 1
      %p161 = scmp.ne.s32.totalorder %s156, %s158
      %p162 = scmp.eq.s32.totalorder %s17, 0
      %p163 = por %p161, %p162
      %p164 = scmp.ne.s32.totalorder %s156, %s158
      %p165 = scmp.eq.s32.totalorder %s22, 1
      %p166 = por %p164, %p165
      %p167 = scmp.ne.s32.totalorder %s158, %s159
      %p168 = scmp.eq.s32.totalorder %s22, 0
      %p169 = por %p167, %p168
      %p170 = scmp.ne.s32.totalorder %s158, %s159
      %p171 = scmp.eq.s32.totalorder %s23, 1
      %p172 = por %p170, %p171
      %p174 = scmp.ne.s32.totalorder %s159, %s173
      %p175 = scmp.eq.s32.totalorder %s23, 0
      %p176 = por %p174, %p175
      %s178 = sadd.s32 %s177, 1
      %p181 = scmp.eq.s32.totalorder %s17, 1
      %p182 = scmp.ne.s32.totalorder %s177, %s179
      %p183 = scmp.eq.s32.totalorder %s17, 0
      %p184 = por %p182, %p183
      %p185 = scmp.ne.s32.totalorder %s177, %s179
      %p186 = scmp.eq.s32.totalorder %s22, 1
      %p187 = por %p185, %p186
      %p188 = scmp.ne.s32.totalorder %s179, %s180
      %p189 = scmp.eq.s32.totalorder %s22, 0
      %p190 = por %p188, %p189
      %p191 = scmp.ne.s32.totalorder %s179, %s180
      %p192 = scmp.eq.s32.totalorder %s23, 1
      %p193 = por %p191, %p192
      %p195 = scmp.ne.s32.totalorder %s180, %s194
      %p196 = scmp.eq.s32.totalorder %s23, 0
      %p197 = por %p195, %p196
      %s198 = ssub.s32 %s24, %s36
      %s199 = ssub.s32 %s25, %s32
      %s200 = sor.u32 %s198, %s199
      %p201 = scmp.eq.s32.totalorder %s200, 0
      %s203 = sadd.s32 %s202, 1
      %s204 = scalar_select %p201, %s202, %s203
      %p207 = pneg %p201
      %p208 = scmp.eq.s32.totalorder %s17, 1
      %p209 = por %p207, %p208
      %p210 = scmp.ne.s32.totalorder %s202, %s205
      %p211 = scmp.eq.s32.totalorder %s17, 0
      %p212 = por %p210, %p211
      %p213 = scmp.ne.s32.totalorder %s202, %s205
      %p214 = scmp.eq.s32.totalorder %s22, 1
      %p215 = por %p213, %p214
      %p216 = scmp.ne.s32.totalorder %s205, %s206
      %p217 = scmp.eq.s32.totalorder %s22, 0
      %p218 = por %p216, %p217
      %p219 = scmp.ne.s32.totalorder %s205, %s206
      %p220 = scmp.eq.s32.totalorder %s23, 1
      %p221 = por %p219, %p220
      %p223 = scmp.ne.s32.totalorder %s206, %s222
      %p224 = scmp.eq.s32.totalorder %s23, 0
      %p225 = por %p223, %p224
      %p226 = scmp.le.s32.totalorder 1, %s17
      %p227 = scmp.lt.s32.totalorder %s17, 3
      %p228 = pnand %p226, %p227
      %p229 = pneg %p228
      // Predicated region
      $region9: #{tpu_custom_call.1} parent=5 // pred_check
        _
      $region10: #{tpu_custom_call.1} parent=5 // pred_check_branch
        %231 = sbr.rel (%p228) target = $region12
      $region11: #{tpu_custom_call.1} parent=5 // pred_region
        %s232 = ssub.s32 %s17, 1
        // Predicated region
        $region13: #{tpu_custom_call.1} parent=11 // pred_check
          %p233 = pneg %p106
        $region14: #{tpu_custom_call.1} parent=11 // pred_check_branch
          %235 = sbr.rel (%p233) target = $region16
        $region15: #{tpu_custom_call.1} parent=11 // pred_region
          _
        $region16: #{tpu_custom_call.1} parent=11 // pred_fallthru
          _
        // Predicated region
        $region17: #{tpu_custom_call.1} parent=11 // pred_check
          %p236 = pneg %p127
        $region18: #{tpu_custom_call.1} parent=11 // pred_check_branch
          %238 = sbr.rel (%p236) target = $region20
        $region19: #{tpu_custom_call.1} parent=11 // pred_region
          _
        $region20: #{tpu_custom_call.1} parent=11 // pred_fallthru
          _
        // Predicated region
        $region21: #{tpu_custom_call.1} parent=11 // pred_check
          %p239 = pneg %p148
        $region22: #{tpu_custom_call.1} parent=11 // pred_check_branch
          %241 = sbr.rel (%p239) target = $region24
        $region23: #{tpu_custom_call.1} parent=11 // pred_region
          _
        $region24: #{tpu_custom_call.1} parent=11 // pred_fallthru
          _
        // Predicated region
        $region25: #{tpu_custom_call.1} parent=11 // pred_check
          %p242 = pneg %p169
        $region26: #{tpu_custom_call.1} parent=11 // pred_check_branch
          %244 = sbr.rel (%p242) target = $region28
        $region27: #{tpu_custom_call.1} parent=11 // pred_region
          _
        $region28: #{tpu_custom_call.1} parent=11 // pred_fallthru
          _
        // Predicated region
        $region29: #{tpu_custom_call.1} parent=11 // pred_check
          %p245 = pneg %p190
        $region30: #{tpu_custom_call.1} parent=11 // pred_check_branch
          %247 = sbr.rel (%p245) target = $region32
        $region31: #{tpu_custom_call.1} parent=11 // pred_region
          _
        $region32: #{tpu_custom_call.1} parent=11 // pred_fallthru
          _
      $region12: #{tpu_custom_call.1} parent=5 // pred_fallthru
        _
      %p248 = scmp.lt.s32.totalorder %s17, 2
      // Predicated region
      $region33: #{tpu_custom_call.1} parent=5 // pred_check
        %p249 = pneg %p248
      $region34: #{tpu_custom_call.1} parent=5 // pred_check_branch
        %251 = sbr.rel (%p249) target = $region36
      $region35: #{tpu_custom_call.1} parent=5 // pred_region
        // Predicated region
        $region37: #{tpu_custom_call.1} parent=35 // pred_check
          %p252 = pneg %p51
        $region38: #{tpu_custom_call.1} parent=35 // pred_check_branch
          %254 = sbr.rel (%p252) target = $region40
        $region39: #{tpu_custom_call.1} parent=35 // pred_region
          %s255 = smul.u32 2, %s25
          %p256 = scmp.lt.s32.totalorder %s24, 1
          %s257 = scalar_select %p256, %s24, 1
          %p258 = scmp.lt.s32.totalorder %s255, 1
          %s259 = scalar_select %p258, %s255, 1
          %s260 = smul.addr %s257, 2
          %s261 = sadd.s32 %s259, %s260
          %s262 = smul.addr %s261, 4
          %s263 = scalar_lea.vmem %s0, %s262
          %s264 = smul.u32 2, %s25
        $region40: #{tpu_custom_call.1} parent=35 // pred_fallthru
          _
        // Predicated region
        $region41: #{tpu_custom_call.1} parent=35 // pred_check
          %p265 = pneg %p79
        $region42: #{tpu_custom_call.1} parent=35 // pred_check_branch
          %267 = sbr.rel (%p265) target = $region44
        $region43: #{tpu_custom_call.1} parent=35 // pred_region
          %s268 = smul.u32 2, %s25
          %p269 = scmp.lt.s32.totalorder %s24, 1
          %s270 = scalar_select %p269, %s24, 1
          %p271 = scmp.lt.s32.totalorder %s268, 1
          %s272 = scalar_select %p271, %s268, 1
          %s273 = smul.addr %s270, 2
          %s274 = sadd.s32 %s272, %s273
          %s275 = smul.addr %s274, 4
          %s276 = scalar_lea.vmem %s1, %s275
          %s277 = smul.u32 2, %s25
        $region44: #{tpu_custom_call.1} parent=35 // pred_fallthru
          _
      $region36: #{tpu_custom_call.1} parent=5 // pred_fallthru
        _
      %p278 = scmp.le.s32.totalorder 1, %s17
      %p279 = scmp.lt.s32.totalorder %s17, 3
      %p280 = pnand %p278, %p279
      %p281 = pneg %p280
      // Predicated region
      $region45: #{tpu_custom_call.1} parent=5 // pred_check
        _
      $region46: #{tpu_custom_call.1} parent=5 // pred_check_branch
        %283 = sbr.rel (%p280) target = $region48
      $region47: #{tpu_custom_call.1} parent=5 // pred_region
        %s284 = ssub.s32 %s17, 1
        %s285 = smul.u32 2, %s27
        %p286 = scmp.lt.s32.totalorder %s26, 1
        %s287 = scalar_select %p286, %s26, 1
        %p288 = scmp.lt.s32.totalorder %s285, 1
        %s289 = scalar_select %p288, %s285, 1
        %s290 = smul.addr %s287, 2
        %s291 = sadd.s32 %s289, %s290
        %s292 = smul.addr %s291, 4
        %s293 = scalar_lea.vmem %s0, %s292
        %p294 = pneg %p57
        %p295 = pneg %p54
        %s296 = smul.u32 2, %s27
        %p297 = scmp.lt.s32.totalorder %s26, 1
        %s298 = scalar_select %p297, %s26, 1
        %p299 = scmp.lt.s32.totalorder %s296, 1
        %s300 = scalar_select %p299, %s296, 1
        %s301 = smul.addr %s298, 2
        %s302 = sadd.s32 %s300, %s301
        %s303 = smul.addr %s302, 4
        %s304 = scalar_lea.vmem %s1, %s303
        %p305 = pneg %p85
        %p306 = pneg %p82
        %p307 = pneg %p106
        %p308 = pneg %p103
        %p309 = pneg %p127
        %p310 = pneg %p124
        %p311 = pneg %p148
        %p312 = pneg %p145
        %p313 = pneg %p169
        %p314 = pneg %p166
        %p315 = pneg %p190
        %p316 = pneg %p187
        %p317 = pneg %p218
        %p318 = pneg %p215
        %s319 = sand.u32 %s205, 1
        %s320 = scalar_lea.sflag [#allocation4], %s319
        %s321 = sand.u32 %s205, 1
        %s322 = smul.addr %s321, 8
        %s323 = scalar_lea.vmem [#allocation3], %s322
        %s324 = smul.u32 2, %s27
        %p325 = scmp.lt.s32.totalorder %s26, 1
        %s326 = scalar_select %p325, %s26, 1
        %p327 = scmp.lt.s32.totalorder %s324, 1
        %s328 = scalar_select %p327, %s324, 1
        %s329 = smul.addr %s326, 2
        %s330 = sadd.s32 %s328, %s329
        %s331 = smul.addr %s330, 4
        %s332 = scalar_lea.vmem %s0, %s331
        %s333 = smul.u32 2, %s27
        %s334 = smul.u32 2, %s27
        %p335 = scmp.lt.s32.totalorder %s26, 1
        %s336 = scalar_select %p335, %s26, 1
        %p337 = scmp.lt.s32.totalorder %s334, 1
        %s338 = scalar_select %p337, %s334, 1
        %s339 = smul.addr %s336, 2
        %s340 = sadd.s32 %s338, %s339
        %s341 = smul.addr %s340, 4
        %s342 = scalar_lea.vmem %s1, %s341
        %s343 = smul.u32 2, %s27
        %s344 = smul.u32 2, %s27
        %v345 = vld [vmem:[%s332] sm:$0xff]
        %v346 = vld [vmem:[%s342] sm:$0xff]
        %v347 = vld [vmem:[%s2] sm:$0xff]
        %v348 = vld [vmem:[%s3] sm:$0xff]
        %v350 = vcombine.high %v346, %v346
        %vm351 = vcmask 31744
        %v353 = vsel %vm351, %v348, 0
        %vm355 = vcmask 1043456
        %v356 = vsel %vm355, %v346, 0
        %v358 = vsel %vm355, %v350, 0
        %360 = vmatprep.subr.mxu0 0.0
        %361 = vmatpush1.msra.mxu0 0.0
        %362 = vmatprep.subr.mxu0 0.0
        %363 = vmatpush1.msra.mxu0 0.0
        %364 = vmatprep.subr.mxu0 0.0
        %365 = vmatpush1.msra.mxu0 0.0
        %366 = vmatprep.subr.mxu0 0.0
        %367 = vmatpush1.msra.mxu0 0.0
        %368 = vmatprep.subr.mxu0 0.0
        %369 = vmatpush1.msra.mxu0 0.0
        %370 = vmatprep.subr.mxu0 0.0
        %371 = vmatpush1.msra.mxu0 0.0
        %372 = vmatprep.subr.mxu0 0.0
        %373 = vmatpush1.msra.mxu0 0.0
        %374 = vmatprep.subr.mxu0 0.0
        %375 = vmatpush1.msra.mxu0 0.0
        %376 = vmatprep.subr.mxu0 0.0
        %377 = vmatpush1.msra.mxu0 0.0
        %378 = vmatprep.subr.mxu0 0.0
        %379 = vmatpush1.msra.mxu0 0.0
        %380 = vmatprep.subr.mxu0 0.0
        %381 = vmatpush1.msra.mxu0 0.0
        %382 = vmatprep.subr.mxu0 0.0
        %383 = vmatpush1.msra.mxu0 0.0
        %384 = vmatprep.subr.mxu0 0.0
        %385 = vmatpush1.msra.mxu0 0.0
        %386 = vmatprep.subr.mxu0 0.0
        %387 = vmatpush1.msra.mxu0 0.0
        %388 = vmatprep.subr.mxu0 0.0
        %389 = vmatpush1.msra.mxu0 0.0
        %390 = vmatprep.subr.mxu0 %v358
        %391 = vmatpush1.msra.mxu0 %v356
        %392 = vmatprep.subr.mxu0 0.0
        %393 = vmatpush2.msra.mxu0 0.0
        %394 = vmatprep.subr.mxu0 0.0
        %395 = vmatpush2.msra.mxu0 0.0
        %396 = vmatprep.subr.mxu0 0.0
        %397 = vmatpush2.msra.mxu0 0.0
        %398 = vmatprep.subr.mxu0 0.0
        %399 = vmatpush2.msra.mxu0 0.0
        %400 = vmatprep.subr.mxu0 0.0
        %401 = vmatpush2.msra.mxu0 0.0
        %402 = vmatprep.subr.mxu0 0.0
        %403 = vmatpush2.msra.mxu0 0.0
        %404 = vmatprep.subr.mxu0 0.0
        %405 = vmatpush2.msra.mxu0 0.0
        %406 = vmatprep.subr.mxu0 0.0
        %407 = vmatpush2.msra.mxu0 0.0
        %408 = vmatprep.subr.mxu0 0.0
        %409 = vmatpush2.msra.mxu0 0.0
        %410 = vmatprep.subr.mxu0 0.0
        %411 = vmatpush2.msra.mxu0 0.0
        %412 = vmatprep.subr.mxu0 0.0
        %413 = vmatpush2.msra.mxu0 0.0
        %414 = vmatprep.subr.mxu0 0.0
        %415 = vmatpush2.msra.mxu0 0.0
        %416 = vmatprep.subr.mxu0 0.0
        %417 = vmatpush2.msra.mxu0 0.0
        %418 = vmatprep.subr.mxu0 0.0
        %419 = vmatpush2.msra.mxu0 0.0
        %420 = vmatprep.subr.mxu0 0.0
        %421 = vmatpush2.msra.mxu0 0.0
        %422 = vmatprep.subr.mxu0 0.0
        %423 = vmatpush2.msra.mxu0 0.0
        %424 = vmatprep.mubr.f32.mxu0 0.0
        %425 = vmatmul.mubr.f32.gmra.mxu0 %v353
        %v426 = vpop.f32.mrf.mxu0
        %v427 = vadd.f32 0.0, %v426
        %v428 = vpop.f32.mrf.mxu0
        %v429 = vadd.f32 0.0, %v428
        %430 = vdwg.mxu0
        %v432 = vcombine.high %v345, %v345
        %v434 = vsel %vm351, %v347, 0
        %v436 = vsel %vm355, %v345, 0
        %v438 = vsel %vm355, %v432, 0
        %440 = vmatprep.subr.mxu0 0.0
        %441 = vmatpush1.msra.mxu0 0.0
        %442 = vmatprep.subr.mxu0 0.0
        %443 = vmatpush1.msra.mxu0 0.0
        %444 = vmatprep.subr.mxu0 0.0
        %445 = vmatpush1.msra.mxu0 0.0
        %446 = vmatprep.subr.mxu0 0.0
        %447 = vmatpush1.msra.mxu0 0.0
        %448 = vmatprep.subr.mxu0 0.0
        %449 = vmatpush1.msra.mxu0 0.0
        %450 = vmatprep.subr.mxu0 0.0
        %451 = vmatpush1.msra.mxu0 0.0
        %452 = vmatprep.subr.mxu0 0.0
        %453 = vmatpush1.msra.mxu0 0.0
        %454 = vmatprep.subr.mxu0 0.0
        %455 = vmatpush1.msra.mxu0 0.0
        %456 = vmatprep.subr.mxu0 0.0
        %457 = vmatpush1.msra.mxu0 0.0
        %458 = vmatprep.subr.mxu0 0.0
        %459 = vmatpush1.msra.mxu0 0.0
        %460 = vmatprep.subr.mxu0 0.0
        %461 = vmatpush1.msra.mxu0 0.0
        %462 = vmatprep.subr.mxu0 0.0
        %463 = vmatpush1.msra.mxu0 0.0
        %464 = vmatprep.subr.mxu0 0.0
        %465 = vmatpush1.msra.mxu0 0.0
        %466 = vmatprep.subr.mxu0 0.0
        %467 = vmatpush1.msra.mxu0 0.0
        %468 = vmatprep.subr.mxu0 0.0
        %469 = vmatpush1.msra.mxu0 0.0
        %470 = vmatprep.subr.mxu0 %v438
        %471 = vmatpush1.msra.mxu0 %v436
        %472 = vmatprep.subr.mxu0 0.0
        %473 = vmatpush2.msra.mxu0 0.0
        %474 = vmatprep.subr.mxu0 0.0
        %475 = vmatpush2.msra.mxu0 0.0
        %476 = vmatprep.subr.mxu0 0.0
        %477 = vmatpush2.msra.mxu0 0.0
        %478 = vmatprep.subr.mxu0 0.0
        %479 = vmatpush2.msra.mxu0 0.0
        %480 = vmatprep.subr.mxu0 0.0
        %481 = vmatpush2.msra.mxu0 0.0
        %482 = vmatprep.subr.mxu0 0.0
        %483 = vmatpush2.msra.mxu0 0.0
        %484 = vmatprep.subr.mxu0 0.0
        %485 = vmatpush2.msra.mxu0 0.0
        %486 = vmatprep.subr.mxu0 0.0
        %487 = vmatpush2.msra.mxu0 0.0
        %488 = vmatprep.subr.mxu0 0.0
        %489 = vmatpush2.msra.mxu0 0.0
        %490 = vmatprep.subr.mxu0 0.0
        %491 = vmatpush2.msra.mxu0 0.0
        %492 = vmatprep.subr.mxu0 0.0
        %493 = vmatpush2.msra.mxu0 0.0
        %494 = vmatprep.subr.mxu0 0.0
        %495 = vmatpush2.msra.mxu0 0.0
        %496 = vmatprep.subr.mxu0 0.0
        %497 = vmatpush2.msra.mxu0 0.0
        %498 = vmatprep.subr.mxu0 0.0
        %499 = vmatpush2.msra.mxu0 0.0
        %500 = vmatprep.subr.mxu0 0.0
        %501 = vmatpush2.msra.mxu0 0.0
        %502 = vmatprep.subr.mxu0 0.0
        %503 = vmatpush2.msra.mxu0 0.0
        %504 = vmatprep.mubr.f32.mxu0 0.0
        %505 = vmatmul.mubr.f32.gmra.mxu0 %v434
        %v506 = vpop.f32.mrf.mxu0
        %v507 = vadd.f32 %v427, %v506
        %v508 = vpop.f32.mrf.mxu0
        %v509 = vadd.f32 %v429, %v508
        %510 = vdwg.mxu0
        %v511 = vld [vmem:[%s4] sm:$0xff]
        %513 = vset.pattern.permute.xlu0 0
        %514 = vperm.xlu0 %513, %v511
        %v515 = vpop.permute.xlu0 %514
        %v517 = vadd.f32 %v507, %v515
        %v518 = vadd.f32 %v509, %v515
        %v519 = vmax.f32 %v517, 0.0
        %v520 = vmax.f32 %v518, 0.0
        %v521 = vld [vmem:[%s5] sm:$0xff]
        %523 = vset.pattern.permute.xlu0 0
        %524 = vperm.xlu0 %523, %v521
        %v525 = vpop.permute.xlu0 %524
        %v527 = vmul.f32 %v519, %v525
        %v528 = vmul.f32 %v520, %v525
        %v529 = vrot.slane %v527, 4
        %v530 = vadd.f32 %v527, %v529
        %v531 = vrot.slane %v530, 2
        %v532 = vadd.f32 %v530, %v531
        %v533 = vrot.slane %v532, 1
        %v534 = vadd.f32 %v532, %v533
        %v535 = vrot.slane %v528, 4
        %v536 = vadd.f32 %v528, %v535
        %v537 = vrot.slane %v536, 2
        %v538 = vadd.f32 %v536, %v537
        %v539 = vrot.slane %v538, 1
        %v540 = vadd.f32 %v538, %v539
        %s541 = sld [smem:[#allocation2]]
        %v542 = vstv %s541
        %v543 = vadd.f32 %v534, %v542
        %v544 = vadd.f32 %v540, %v542
        %v545 = vxor.u32 %v543, 2147483648
        %v546 = vxor.u32 %v544, 2147483648
        %v547 = vmul.f32 %v545, 1.442695
        %v548 = vpow.pop %v547
        %v549 = vmul.f32 %v546, 1.442695
        %v550 = vpow.pop %v549
        %v551 = vadd.f32 %v548, 1.0
        %v552 = vadd.f32 %v550, 1.0
        %v553 = vrcp.pop %v551
        %v554 = vmul.f32 1.0, %v553
        %v555 = vrcp.pop %v552
        %v556 = vmul.f32 1.0, %v555
        %v559 = vcombine.low %v554, %v556
        %v561 = vmul.f32 %v346, %v559
        %562 = vst [vmem:[%s323] sm:$0xff] %v561
        %s563 = sand.u32 %s205, 1
        %s564 = scalar_lea.sflag [#allocation4], %s563
        %s565 = sand.u32 %s205, 1
        %s566 = smul.addr %s565, 8
        %s567 = scalar_lea.vmem [#allocation3], %s566
        // Predicated region
        $region49: #{tpu_custom_call.1} parent=47 // pred_check
          %p568 = pneg %p215
        $region50: #{tpu_custom_call.1} parent=47 // pred_check_branch
          %570 = sbr.rel (%p568) target = $region52
        $region51: #{tpu_custom_call.1} parent=47 // pred_region
          %s571 = smul.u32 2, %s27
          %s573 = ssub.s32 128, 128
          %574 = vsyncadd %s564, %s573
          %s575 = smul.addr %s26, 2
          %s576 = sadd.s32 %s571, %s575
          %s577 = smul.addr %s576, 64
          %s578 = scalar_lea.hbm %s7, %s577
          %s580 = sshll.u32 %s567, 4
          %s581 = int_to_ptr.vmem [resolvable:$true] %s580
          %583 = dma.vmem_to_hbm [thread:$0]  %s581, 128, %s578, %s564
        $region52: #{tpu_custom_call.1} parent=47 // pred_fallthru
          _
      $region48: #{tpu_custom_call.1} parent=5 // pred_fallthru
        _
      %p584 = scmp.le.s32.totalorder 2, %s17
      // Predicated region
      $region53: #{tpu_custom_call.1} parent=5 // pred_check
        %p585 = pneg %p584
      $region54: #{tpu_custom_call.1} parent=5 // pred_check_branch
        %587 = sbr.rel (%p585) target = $region56
      $region55: #{tpu_custom_call.1} parent=5 // pred_region
        %s588 = ssub.s32 %s17, 2
        // Predicated region
        $region57: #{tpu_custom_call.1} parent=55 // pred_check
          %p589 = pneg %p221
        $region58: #{tpu_custom_call.1} parent=55 // pred_check_branch
          %591 = sbr.rel (%p589) target = $region60
        $region59: #{tpu_custom_call.1} parent=55 // pred_region
          %s592 = sand.u32 %s206, 1
          %s593 = scalar_lea.sflag [#allocation4], %s592
          %s594 = sand.u32 %s206, 1
          %s595 = smul.addr %s594, 8
          %s596 = scalar_lea.vmem [#allocation3], %s595
          %597 = dma.done %s593, 128
        $region60: #{tpu_custom_call.1} parent=55 // pred_fallthru
          _
      $region56: #{tpu_custom_call.1} parent=5 // pred_fallthru
        _
    $region6: #{tpu_custom_call.1} parent=1 // loop_footer
      %s21 = sadd.s32 1, %s17
    $region7: #{tpu_custom_call.1} parent=1 // loop_footer_branch
      %16 = sbr.rel target = $region3
    $region8: #{tpu_custom_call.1} parent=1 // loop_exit
      _
    %598 = vsyncpa [#allocation4], 1
    %s599 = scalar_lea.sflag [#allocation4], 1
    %600 = vsyncpa %s599, 1

</llo_original>
